<compile_context>
chip_gen: v7x
topology: tpu7x:2x2x1
jax: 0.10.0
libtpu: 0.0.40
codegen_flags: <defaults>
</compile_context>

<pallas_src>
import functools
import math

import jax
import jax.numpy as jnp
from jax.experimental import pallas as pl
from jax.experimental.pallas import tpu as pltpu


def _cdiv(a, b):
    return -(-a // b)


def _round_up(a, b):
    return _cdiv(a, b) * b


def _round_down(a, b):
    return (a // b) * b


HALO = 16  # halo-block height (rows); >= KH-1 and a bf16-friendly sublane count


# ----------------------------------------------------------------------------
# Stage 1: curve combination over the flattened (weights ++ biases) parameters
# ----------------------------------------------------------------------------
def combine_kernel(coeffs_ref, p_ref, o_ref, *, num_bends):
    """coeffs_ref: SMEM (num_bends,) f32 (scalar-prefetched)
    p_ref : (num_bends, PBLK) f32  per-bend flattened parameter chunk
    o_ref : (1, PBLK)         f32  combined parameter chunk
    """
    acc = coeffs_ref[0] * p_ref[0:1, :]
    for j in range(1, num_bends):            # static unroll; num_bends is tiny
        acc = acc + coeffs_ref[j] * p_ref[j:j + 1, :]
    o_ref[...] = acc                         # keep f32 (no bf16 VPU on v5e)


# ----------------------------------------------------------------------------
# Stage 2: banded-width direct conv, one (TH, Wo*Cout) output slab per step
# ----------------------------------------------------------------------------
def conv_band_kernel(xm_ref, xh_ref, w_ref, b_ref, o_ref, *, kh_taps):
    """xm_ref: (1, TH,   Wp*Cin)    bf16  row block of the padded input
    xh_ref: (1, HALO, Wp*Cin)       bf16  next rows (only first KH-1 are used)
    w_ref : (KH, Wp*Cin, Wo*Cout)   bf16  banded combined weight (one band/kh)
    b_ref : (1, Wo*Cout)            f32   combined bias, width-tiled
    o_ref : (1, TH, Wo*Cout)        bf16  lane-dense, exact-channel output slab
    """
    th = xm_ref.shape[1]
    x = jnp.concatenate([xm_ref[0], xh_ref[0, :kh_taps - 1]], axis=0)
    acc = jnp.dot(x[0:th], w_ref[0], preferred_element_type=jnp.float32)
    for kh in range(1, kh_taps):             # static unroll over the KH row taps
        acc = acc + jnp.dot(x[kh:kh + th], w_ref[kh],
                            preferred_element_type=jnp.float32)
    o_ref[0] = (acc + b_ref[...]).astype(o_ref.dtype)


# ----------------------------------------------------------------------------
# Wrapper
# ----------------------------------------------------------------------------
def _vmem_capacity_bytes():
    try:
        return int(pltpu.get_tpu_info().vmem_capacity_bytes)
    except Exception:
        return 64 * 1024 * 1024              # conservative (v7x-sized) fallback


def curve_conv_transpose2d(x_nchw, weights, biases, coeffs, *, stride=1,
                           padding=1, output_padding=0, row_tile=None):
    """Curved ConvTranspose2d forward (groups=1, dilation=1, bias present).

    x_nchw : (N, Cin, H, W)
    weights: (num_bends, Cin, Cout, KH, KW)  per-bend ConvTranspose2d weights
    biases : (num_bends, Cout)
    coeffs : (num_bends,)                    curve coefficients (Coeffs_t.value)
    """
    N, Cin, H, W = x_nchw.shape
    num_bends, cin_w, Cout, KH, KW = weights.shape
    assert cin_w == Cin
    # TODO(synk): groups > 1, dilation > 1 and bias=None configs not implemented.
    assert 2 <= KH <= HALO + 1, "kernel height outside the supported halo range"
    pc_h, pc_w = KH - 1 - padding, KW - 1 - padding
    assert pc_h >= 0 and pc_w >= 0, "padding > kernel_size-1 (crop) not supported"

    Ho = (H - 1) * stride - 2 * padding + KH + output_padding
    Wo = (W - 1) * stride - 2 * padding + KW + output_padding
    Hd, Wd = (H - 1) * stride + 1, (W - 1) * stride + 1
    Wp = Wd + 2 * pc_w + output_padding       # == Wo + KW - 1
    WpC, WoC = Wp * Cin, Wo * Cout

    vmem_cap = _vmem_capacity_bytes()          # generation-aware (v7x: 64 MiB)
    vmem_limit = int(min(vmem_cap * 3 // 4, 96 * 1024 * 1024))

    # ---------------- stage 1: combine the bends (tiled, flat, f32) ---------
    nw = KH * KW * Cin * Cout
    w_conv = jnp.transpose(weights[:, :, :, ::-1, ::-1], (0, 3, 4, 1, 2))
    flat = jnp.concatenate([w_conv.reshape(num_bends, nw),
                            biases.reshape(num_bends, Cout)],
                           axis=1).astype(jnp.float32)
    P = nw + Cout
    PBLK = min(_round_up(P, 128), 1 << 17)     # <= 512 KiB f32 per bend / block
    P_pad = _round_up(P, PBLK)
    flat = jnp.pad(flat, ((0, 0), (0, P_pad - P)))
    coeffs = coeffs.astype(jnp.float32).reshape(num_bends)

    combined = pl.pallas_call(
        functools.partial(combine_kernel, num_bends=num_bends),
        out_shape=jax.ShapeDtypeStruct((1, P_pad), jnp.float32),
        grid_spec=pltpu.PrefetchScalarGridSpec(
            num_scalar_prefetch=1,             # coeffs live in SMEM
            grid=(P_pad // PBLK,),
            in_specs=[pl.BlockSpec((num_bends, PBLK), lambda i, c: (0, i))],
            out_specs=pl.BlockSpec((1, PBLK), lambda i, c: (0, i)),
        ),
        compiler_params=pltpu.CompilerParams(
            dimension_semantics=("arbitrary",),
            vmem_limit_bytes=vmem_limit),
    )(coeffs, flat)

    w_c = combined[0, :nw].reshape(KH, KW, Cin, Cout).astype(jnp.bfloat16)
    b_c = combined[0, nw:nw + Cout]

    # ---- banded weight: fold (kw, ci) into the matmul contraction (Wp*Cin) --
    # Band_kh[wi*Cin+ci, w*Cout+co] = w_c[kh, wi-w, ci, co] for 0 <= wi-w < KW.
    wi = jnp.arange(Wp)
    wo = jnp.arange(Wo)
    kw_idx = wi[:, None] - wo[None, :]                       # (Wp, Wo)
    valid = (kw_idx >= 0) & (kw_idx < KW)
    gathered = w_c[:, jnp.clip(kw_idx, 0, KW - 1)]           # (KH,Wp,Wo,Cin,Cout)
    band = jnp.where(valid[None, :, :, None, None], gathered,
                     jnp.zeros((), jnp.bfloat16))
    band = jnp.transpose(band, (0, 1, 3, 2, 4)).reshape(KH, WpC, WoC)
    bias_row = jnp.tile(b_c, (Wo,)).reshape(1, WoC).astype(jnp.float32)
    # TODO(synk): for large W or large Cin the banded weight wastes MXU depth /
    # HBM; that regime wants a width-tiled (or per-tap deep-K) kernel instead.

    # ---------------- stage 2: row-blocked banded conv ----------------------
    # Row tile from the generation-specific VMEM budget (double-buffered
    # input/output slabs + the resident banded weight), multiple of 16 rows.
    if row_tile is None:
        per_row = 2 * (WpC * 2) + 2 * (WoC * 2) + WoC * 4    # dbl-buf io + f32 acc
        fixed = 2 * (KH * WpC * WoC * 2) + 2 * (HALO * WpC * 2) + (1 << 20)
        budget = vmem_cap // 2
        TH = _round_down(max(budget - fixed, 0) // max(per_row, 1), 16)
        TH = max(16, min(TH, _round_up(Ho, 16)))
    else:
        TH = max(16, _round_up(row_tile, 16))
    n_rb = _cdiv(Ho, TH)
    if N * n_rb < 2 and Ho > 16:               # keep both v7x TensorCores busy
        TH = max(16, _round_up(_cdiv(Ho, 2), 16))
        n_rb = _cdiv(Ho, TH)
    Ho_pad = n_rb * TH
    Hp = Ho_pad + HALO                          # rows of the padded conv input

    x_nhwc = jnp.transpose(x_nchw, (0, 2, 3, 1)).astype(jnp.bfloat16)
    if stride > 1:
        # TODO(synk): replace zero-dilation with the sub-pixel (stride^2
        # sub-conv) decomposition to avoid convolving over inserted zeros.
        xd = jnp.zeros((N, Hd, Wd, Cin), jnp.bfloat16)
        xd = xd.at[:, ::stride, ::stride, :].set(x_nhwc)
    else:
        xd = x_nhwc
    xp = jnp.pad(xd, ((0, 0), (pc_h, Hp - pc_h - Hd),
                      (pc_w, pc_w + output_padding), (0, 0)))
    xp = xp.reshape(N, Hp, WpC)                 # width-fused, lane-dense minor

    kernel = functools.partial(conv_band_kernel, kh_taps=KH)
    out = pl.pallas_call(
        kernel,
        out_shape=jax.ShapeDtypeStruct((N, Ho_pad, WoC), jnp.bfloat16),
        grid_spec=pltpu.PrefetchScalarGridSpec(
            num_scalar_prefetch=0,
            grid=(N, n_rb),
            in_specs=[
                # main TH-row block (no overlap -> no HBM slab gather)
                pl.BlockSpec((1, TH, WpC), lambda n, i: (n, i, 0)),
                # 16-row halo block starting right after the main block
                pl.BlockSpec((1, HALO, WpC),
                             lambda n, i: (n, ((i + 1) * TH) // HALO, 0)),
                pl.BlockSpec((KH, WpC, WoC), lambda n, i: (0, 0, 0)),
                pl.BlockSpec((1, WoC), lambda n, i: (0, 0)),
            ],
            out_specs=pl.BlockSpec((1, TH, WoC), lambda n, i: (n, i, 0)),
        ),
        compiler_params=pltpu.CompilerParams(
            dimension_semantics=("parallel", "parallel"),
            vmem_limit_bytes=vmem_limit),
    )(xp, xp, band, bias_row)

    out = out[:, :Ho, :].reshape(N, Ho, Wo, Cout)
    return jnp.transpose(out, (0, 3, 1, 2)).astype(x_nchw.dtype)  # back to NCHW


# ----------------------------------------------------------------------------
# Independent reference: scatter-form ConvTranspose2d in f32
# ----------------------------------------------------------------------------
def conv_transpose2d_ref(x, w, b, stride, padding, output_padding):
    """x: (N,Cin,H,W), w: (Cin,Cout,KH,KW), b: (Cout,)  — PyTorch semantics."""
    N, Cin, H, W = x.shape
    _, Cout, KH, KW = w.shape
    Ho = (H - 1) * stride - 2 * padding + KH + output_padding
    Wo = (W - 1) * stride - 2 * padding + KW + output_padding
    full = jnp.zeros((N, Cout, (H - 1) * stride + KH + output_padding,
                      (W - 1) * stride + KW + output_padding), jnp.float32)
    prod = jnp.einsum("nchw,cokl->nohwkl", x, w)
    for kh in range(KH):
        for kw in range(KW):
            full = full.at[:, :, kh:kh + (H - 1) * stride + 1:stride,
                           kw:kw + (W - 1) * stride + 1:stride].add(
                               prod[..., kh, kw])
    out = full[:, :, padding:padding + Ho, padding:padding + Wo]
    return out + b[None, :, None, None]


if __name__ == "__main__":
    # nn.ConvTranspose2d(4, 8, kernel_size=3, stride=1, padding=1) wrapped by
    # the curve module with 3 bends.
    N, Cin, H, W = 2, 4, 16, 16
    Cout, KH, KW = 8, 3, 3
    num_bends = 3
    stride, padding, output_padding = 1, 1, 0

    # reset_parameters(): stdv = 1/sqrt(in_channels * prod(kernel_size))
    stdv = 1.0 / math.sqrt(Cin * KH * KW)

    key = jax.random.PRNGKey(0)
    key_x, key_w, key_b = jax.random.split(key, 3)
    x = jax.random.normal(key_x, (N, Cin, H, W), dtype=jnp.float32)
    weights = jax.random.uniform(
        key_w, (num_bends, Cin, Cout, KH, KW), minval=-stdv, maxval=stdv,
        dtype=jnp.float32)
    biases = jax.random.uniform(
        key_b, (num_bends, Cout), minval=-stdv, maxval=stdv, dtype=jnp.float32)

    # Coeffs_t.value: Bezier coefficients at t = 0.5 for 3 bends
    t = 0.5
    coeffs = jnp.array([(1 - t) ** 2, 2 * t * (1 - t), t ** 2],
                       dtype=jnp.float32)

    out = curve_conv_transpose2d(x, weights, biases, coeffs, stride=stride,
                                 padding=padding,
                                 output_padding=output_padding)
    out = jax.block_until_ready(out)

    # Reference: combine bends in f32, direct scatter-form ConvTranspose2d.
    w_ref = jnp.einsum("b,bioxy->ioxy", coeffs, weights)
    b_ref = jnp.einsum("b,bo->o", coeffs, biases)
    ref = conv_transpose2d_ref(x, w_ref, b_ref, stride, padding,
                               output_padding)

    assert out.shape == (N, Cout, H, W), out.shape
    # bf16 MXU inputs + bf16 HBM writeback -> bf16-level tolerance.
    max_err = float(jnp.max(jnp.abs(out - ref)))
    assert jnp.allclose(out, ref, atol=3e-2, rtol=3e-2), max_err
    print("KERNEL_OK")
</pallas_src>

<mosaic_0001>
module attributes {stable_mosaic.version = 11 : i64} {
  func.func @combine_kernel(%arg0: i32, %arg1: memref<3xf32, #tpu.memory_space<smem>>, %arg2: memref<3x384xf32, #tpu.memory_space<vmem>>, %arg3: memref<1x384xf32, #tpu.memory_space<vmem>>) attributes {dimension_semantics = [#tpu.dimension_semantics<arbitrary>], iteration_bounds = array<i64: 1>, scalar_prefetch = 1 : i64, scratch_operands = 0 : i64, tpu.core_type = #tpu.core_type<tc>, window_params = [{transform_indices = @transform_0, window_bounds = array<i64: 3, 384>}, {transform_indices = @transform_1, window_bounds = array<i64: 1, 384>}]} {
    %c0 = arith.constant 0 : index
    %0 = memref.load %arg1[%c0] : memref<3xf32, #tpu.memory_space<smem>>
    %c0_0 = arith.constant 0 : index
    %c0_1 = arith.constant 0 : index
    %1 = vector.load %arg2[%c0_0, %c0_1] : memref<3x384xf32, #tpu.memory_space<vmem>>, vector<1x384xf32>
    %2 = vector.broadcast %0 : f32 to vector<1x384xf32>
    %3 = arith.mulf %2, %1 : vector<1x384xf32>
    %c1 = arith.constant 1 : index
    %4 = memref.load %arg1[%c1] : memref<3xf32, #tpu.memory_space<smem>>
    %c1_2 = arith.constant 1 : index
    %c0_3 = arith.constant 0 : index
    %5 = vector.load %arg2[%c1_2, %c0_3] : memref<3x384xf32, #tpu.memory_space<vmem>>, vector<1x384xf32>
    %6 = vector.broadcast %4 : f32 to vector<1x384xf32>
    %7 = arith.mulf %6, %5 : vector<1x384xf32>
    %8 = arith.addf %3, %7 : vector<1x384xf32>
    %c2 = arith.constant 2 : index
    %9 = memref.load %arg1[%c2] : memref<3xf32, #tpu.memory_space<smem>>
    %c2_4 = arith.constant 2 : index
    %c0_5 = arith.constant 0 : index
    %10 = vector.load %arg2[%c2_4, %c0_5] : memref<3x384xf32, #tpu.memory_space<vmem>>, vector<1x384xf32>
    %11 = vector.broadcast %9 : f32 to vector<1x384xf32>
    %12 = arith.mulf %11, %10 : vector<1x384xf32>
    %13 = arith.addf %8, %12 : vector<1x384xf32>
    %c0_6 = arith.constant 0 : index
    %c0_7 = arith.constant 0 : index
    %14 = vector.load %arg3[%c0_6, %c0_7] : memref<1x384xf32, #tpu.memory_space<vmem>>, vector<1x384xf32>
    tpu.vector_store %arg3[%c0_6, %c0_7], %13 {strides = array<i32>} : memref<1x384xf32, #tpu.memory_space<vmem>>, vector<1x384xf32>,
    return
  }
  func.func @transform_0(%arg0: i32, %arg1: memref<3xf32, #tpu.memory_space<smem>>) -> (i32, i32) {
    %c0_i32 = arith.constant 0 : i32
    %c0_i32_0 = arith.constant 0 : i32
    return %c0_i32, %arg0 : i32, i32
  }
  func.func @transform_1(%arg0: i32, %arg1: memref<3xf32, #tpu.memory_space<smem>>) -> (i32, i32) {
    %c0_i32 = arith.constant 0 : i32
    %c0_i32_0 = arith.constant 0 : i32
    return %c0_i32, %arg0 : i32, i32
  }
}

</mosaic_0001>

<llo_original>
// kernel: tpu_custom_call.1
$region0: #{tpu_custom_call.1}
  #allocation0 [shape = 'u32[]', space=smem, size = 0x4, offset = 0x4, fixed_abs, tag = 'smem constant byte address 0x4 - core index']
  #allocation1 [shape = 'u32[144,128]{1,0:T(1,128)}', space=vmem, size = 0x12000, scoped, tag = 'internal scratch']
  #allocation2 [shape = 's32[1]{0}', space=sflag, size = 0x4, scoped, tag = 'scoped memory for tpu_custom_call.1']
  #allocation3 [shape = 'u8[512]{0}', space=smem, size = 0x200, scoped, tag = 'prefetched SMEM operand 0']
  %s0 = inlined_call_operand.hbm [shape: f32[3], index: 0, kind: input, shape index: {}]
  %s1 = inlined_call_operand.hbm [shape: f32[3,384], index: 1, kind: input, shape index: {}]
  %s2 = inlined_call_operand.hbm [shape: f32[1,384], index: 2, kind: output, shape index: {}]
  %s3 = sld [smem:[#allocation0]]
  $region18: #{tpu_custom_call.1} parent=0
    _
  %s5 = ssub.s32 1, %s3
  %s6 = scalar_select 0, %s5, %s3
  %8 = dma.hbm_to_smem %s0, 16, [#allocation3], [#allocation2]
  %9 = dma.done [#allocation2], 16
  %10 = sfence
  $region1: #{tpu_custom_call.1} parent=0
    #allocation4 [shape = 'u8[6144]{0}', space=vmem, size = 0x1800, scoped, tag = 'input window, operand 1, single buffered']
    #allocation5 [shape = 's32[1]{0}', space=sflag, size = 0x4, scoped, tag = 'scoped memory for tpu_custom_call.1']
    #allocation6 [shape = 's32[1]{0}', space=sflag, size = 0x4, scoped, tag = 'scoped memory for tpu_custom_call.1']
    #allocation7 [shape = 'u8[1536]{0}', space=vmem, size = 0x800, scoped, tag = 'output window, operand 0, single buffered']
    %11 = vsyncpa [#allocation5], 0
    %12 = vsyncpa [#allocation6], 0
    // Predicated region
    $region2: #{tpu_custom_call.1} parent=1 // pred_check
      _
    $region3: #{tpu_custom_call.1} parent=1 // pred_check_branch
      %14 = sbr.rel (0) target = $region5
    $region4: #{tpu_custom_call.1} parent=1 // pred_region
      %s16 = ssub.s32 192, 192
      %17 = vsyncadd [#allocation5], %s16
      %s19 = sshll.u32 [#allocation4], 4
      %s20 = int_to_ptr.vmem [resolvable:$true] %s19
      %22 = dma.hbm_to_vmem [thread:$0]  %s1, 192, %s20, [#allocation5]
    $region5: #{tpu_custom_call.1} parent=1 // pred_fallthru
      _
    // Predicated region
    $region6: #{tpu_custom_call.1} parent=1 // pred_check
      _
    $region7: #{tpu_custom_call.1} parent=1 // pred_check_branch
      %24 = sbr.rel (0) target = $region9
    $region8: #{tpu_custom_call.1} parent=1 // pred_region
      %25 = dma.done [#allocation5], 192
    $region9: #{tpu_custom_call.1} parent=1 // pred_fallthru
      _
    %s26 = sld [smem:[#allocation3]]
    %v27 = vld [vmem:[#allocation4] ss:$4 sm:$0x7]
    %v28 = vstv %s26
    %v29 = vmul.f32 %v28, %v27
    %s30 = sld [smem:[#allocation3 + $0x1]]
    %s31 = scalar_lea.vmem [#allocation4], 1
    %v32 = vld [vmem:[%s31] ss:$4 sm:$0x7]
    %v33 = vstv %s30
    %v34 = vmul.f32 %v33, %v32
    %v35 = vadd.f32 %v29, %v34
    %s36 = sld [smem:[#allocation3 + $0x2]]
    %s37 = scalar_lea.vmem [#allocation4], 2
    %v38 = vld [vmem:[%s37] ss:$4 sm:$0x7]
    %v39 = vstv %s36
    %v40 = vmul.f32 %v39, %v38
    %v41 = vadd.f32 %v35, %v40
    %v42 = vlaneseq
    %vm43 = vcmp.ge.s32.totalorder %v42, 0
    %vm44 = vcmp.lt.s32.totalorder %v42, 384
    %vm45 = vmand %vm43, %vm44
    %46 = vst.msk [vmem:[#allocation7] sm:$0x7] %vm45, %v41
    // Predicated region
    $region10: #{tpu_custom_call.1} parent=1 // pred_check
      _
    $region11: #{tpu_custom_call.1} parent=1 // pred_check_branch
      %48 = sbr.rel (0) target = $region13
    $region12: #{tpu_custom_call.1} parent=1 // pred_region
      %s50 = ssub.s32 48, 48
      %51 = vsyncadd [#allocation6], %s50
      %s53 = sshll.u32 [#allocation7], 4
      %s54 = int_to_ptr.vmem [resolvable:$true] %s53
      %56 = dma.vmem_to_hbm [thread:$0]  %s54, 48, %s2, [#allocation6]
    $region13: #{tpu_custom_call.1} parent=1 // pred_fallthru
      _
    // Predicated region
    $region14: #{tpu_custom_call.1} parent=1 // pred_check
      _
    $region15: #{tpu_custom_call.1} parent=1 // pred_check_branch
      %58 = sbr.rel (0) target = $region17
    $region16: #{tpu_custom_call.1} parent=1 // pred_region
      %59 = dma.done [#allocation6], 48
    $region17: #{tpu_custom_call.1} parent=1 // pred_fallthru
      _
    %60 = vsyncpa [#allocation5], 1
    %61 = vsyncpa [#allocation6], 1

</llo_original>
